<compile_context>
chip_gen: v5e
topology: v5e:2x2
jax: 0.10.0
libtpu: 0.0.40
codegen_flags: <defaults>
</compile_context>

<pallas_src>
import jax
import jax.numpy as jnp
from jax import lax
from jax.experimental import pallas as pl
from jax.experimental.pallas import tpu as pltpu

C_IN, C1, C2 = 3, 2, 20          # conv channel counts
K1, K2 = 3, 48                   # conv kernel widths (kernel heights are 1)
W_IN = K1 + K2 - 1               # 50 -- required so conv2 reduces width to 1
W1_OUT = W_IN - (K1 - 1)         # 48 -- conv1 output width (= K2)

# Packed SMEM scalar layout:
#   [ w1 flat in (co, ci, kw) order : 0..17 | b1 : 18..19 | w3_lastAction : 20 | b_total : 21 ]
_NS = C1 * C_IN * K1 + C1 + 2    # 22


def cnn_policy_kernel(x_ref, la_ref, s_ref, w23_ref, out_ref):
    # x_ref  : VMEM (3, H, 50)   input planes; H on sublanes, width on lanes
    # la_ref : VMEM (H, 1)       lastAction column
    # s_ref  : SMEM (22,)        packed conv1 weights/bias + folded scalars
    # w23_ref: VMEM (2, 1, 48)   conv2∘conv3 folded weights per conv1 out-channel
    # out_ref: VMEM (H+1, 1)     softmax([0, logits])

    # conv1 (2 out-channels, kernel (1,3)) as 18 scalar-broadcast MACs on the VPU.
    # Slab-outer / channel-inner: each input plane is loaded exactly once; the
    # three width-shifts are static lane slices (XLU relayout) of that one load.
    acc0 = None                                  # (H, 48) accumulators, 1 vreg each
    acc1 = None
    for ci in range(C_IN):
        row = x_ref[ci]                          # (H, 50) -- single vreg at H<=8
        for kw in range(K1):
            sh = row[:, kw:kw + W1_OUT]          # (H, 48) shifted view
            w_a = s_ref[ci * K1 + kw]            # conv1 weight, out-channel 0
            w_b = s_ref[C_IN * K1 + ci * K1 + kw]  # conv1 weight, out-channel 1
            acc0 = w_a * sh if acc0 is None else acc0 + w_a * sh
            acc1 = w_b * sh if acc1 is None else acc1 + w_b * sh

    # conv1 bias + ReLU, then weight by the folded conv2∘conv3 row and collapse
    # both conv1 channels.  (No nonlinearity between conv2 and conv3 in torch.)
    f0 = jnp.maximum(acc0 + s_ref[2 * C_IN * K1], 0.0) * w23_ref[0]        # (H, 48)
    f1 = jnp.maximum(acc1 + s_ref[2 * C_IN * K1 + 1], 0.0) * w23_ref[1]    # (H, 48)
    combined = f0 + f1

    # Per-row logits: cross-lane reduce (XLU) + lastAction term + folded bias.
    logits = (jnp.sum(combined, axis=-1, keepdims=True)
              + la_ref[...] * s_ref[_NS - 2] + s_ref[_NS - 1])             # (H, 1)

    # Softmax over [0, logits] without materializing the concatenation: the
    # implicit 0-logit contributes max(.,0) and exp(-m) to the denominator.
    m = jnp.maximum(jnp.max(logits, axis=0, keepdims=True), 0.0)           # (1, 1)
    e = jnp.exp(logits - m)                                                # (H, 1)
    e0 = jnp.exp(-m)                                                       # (1, 1)
    inv = pl.reciprocal(jnp.sum(e, axis=0, keepdims=True) + e0, approx=True)
    out_ref[:1] = e0 * inv
    out_ref[1:] = e * inv


def fold_params(params):
    """Parameter-only folding.  Run ONCE per parameter set, not per forward call."""
    w1 = params["w1"].astype(jnp.float32).reshape(-1)            # (18,) (co, ci, kw)
    b1 = params["b1"].astype(jnp.float32)                        # (2,)
    w3 = params["w3"].astype(jnp.float32).reshape(-1)            # (21,) [lastAction, 20 feats]
    w3_rest = w3[1:]                                             # (20,)
    # conv2 ∘ conv3 fold (valid because the torch forward skips relu2).
    w23 = jnp.einsum("oik,o->ik",
                     params["w2"].astype(jnp.float32)[:, :, 0, :], w3_rest)    # (2, 48)
    b_total = (jnp.dot(params["b2"].astype(jnp.float32), w3_rest)
               + params["b3"].astype(jnp.float32)[0])
    s = jnp.concatenate([w1, b1, jnp.stack([w3[0], b_total])])   # (22,)
    return {"s": s, "w23": w23.reshape(C1, 1, K2)}


@jax.jit
def cnn_policy_forward(x, last_action, folded):
    H = x.shape[1]
    x32 = x.astype(jnp.float32)                                  # (3, H, 50)
    la = last_action.astype(jnp.float32).reshape(H, 1)           # (H, 1)
    return pl.pallas_call(
        cnn_policy_kernel,
        out_shape=jax.ShapeDtypeStruct((H + 1, 1), jnp.float32),
        in_specs=[
            pl.BlockSpec(memory_space=pltpu.MemorySpace.VMEM),   # x planes
            pl.BlockSpec(memory_space=pltpu.MemorySpace.VMEM),   # lastAction column
            pl.BlockSpec(memory_space=pltpu.MemorySpace.SMEM),   # packed scalars
            pl.BlockSpec(memory_space=pltpu.MemorySpace.VMEM),   # folded w23
        ],
        out_specs=pl.BlockSpec(memory_space=pltpu.MemorySpace.VMEM),
    )(x32, la, folded["s"], folded["w23"])


def init_params(key):
    # Deterministic synthetic init matching the torch shapes
    # (xavier_uniform for weights, torch-default uniform for biases).
    k = jax.random.split(key, 6)

    def xavier(kk, shape):
        fan_out = shape[0] * shape[2] * shape[3]
        fan_in = shape[1] * shape[2] * shape[3]
        bound = (6.0 / (fan_in + fan_out)) ** 0.5
        return jax.random.uniform(kk, shape, jnp.float32, -bound, bound)

    def bias(kk, shape, fan_in):
        bound = 1.0 / (fan_in ** 0.5)
        return jax.random.uniform(kk, shape, jnp.float32, -bound, bound)

    return {
        "w1": xavier(k[0], (C1, C_IN, 1, K1)),
        "b1": bias(k[1], (C1,), C_IN * K1),
        "w2": xavier(k[2], (C2, C1, 1, K2)),
        "b2": bias(k[3], (C2,), C1 * K2),
        "w3": xavier(k[4], (1, C2 + 1, 1, 1)),
        "b3": bias(k[5], (1,), C2 + 1),
    }


def reference_forward(x, last_action, params):
    # Pure-JAX reference replicating the PyTorch forward exactly
    # (note: self.relu2 is defined but never applied in the torch forward).
    H = x.shape[1]
    xb = x[None].astype(jnp.float32)
    y1 = lax.conv_general_dilated(xb, params["w1"], (1, 1), "VALID",
                                  dimension_numbers=("NCHW", "OIHW", "NCHW"))
    y1 = jnp.maximum(y1 + params["b1"][None, :, None, None], 0.0)
    y2 = lax.conv_general_dilated(y1, params["w2"], (1, 1), "VALID",
                                  dimension_numbers=("NCHW", "OIHW", "NCHW"))
    y2 = (y2 + params["b2"][None, :, None, None])[0, :, :, 0]         # (20, H)
    z = jnp.concatenate([last_action.reshape(H, 1), y2.T], axis=1).T  # (21, H)
    y3 = jnp.einsum("c,ch->h", params["w3"].reshape(-1), z) + params["b3"][0]
    full = jnp.concatenate([jnp.zeros((1,), jnp.float32), y3])
    return jax.nn.softmax(full).reshape(H + 1, 1)


if __name__ == "__main__":
    key = jax.random.PRNGKey(0)
    pk, xk, lk = jax.random.split(key, 3)
    params = init_params(pk)
    folded = fold_params(params)            # parameter folding: once, off the hot path

    H = 8
    x = jax.random.normal(xk, (C_IN, H, W_IN), jnp.float32)        # (3, 8, 50)
    last_action = jax.random.normal(lk, (H,), jnp.float32)         # (8,)

    out = cnn_policy_forward(x, last_action, folded)
    out = jax.block_until_ready(out)

    ref = reference_forward(x, last_action, params)
    assert out.shape == (H + 1, 1), out.shape
    assert jnp.allclose(out, ref, atol=1e-3, rtol=1e-3), (out, ref)
    print("KERNEL_OK")
</pallas_src>

<mosaic_0001>
module attributes {stable_mosaic.version = 11 : i64} {
  func.func @cnn_policy_kernel(%arg0: memref<3x8x50xf32, #tpu.memory_space<vmem>>, %arg1: memref<8x1xf32, #tpu.memory_space<vmem>>, %arg2: memref<22xf32, #tpu.memory_space<smem>>, %arg3: memref<2x1x48xf32, #tpu.memory_space<vmem>>, %arg4: memref<9x1xf32, #tpu.memory_space<vmem>>) attributes {dimension_semantics = [], scalar_prefetch = 0 : i64, scratch_operands = 0 : i64, tpu.core_type = #tpu.core_type<tc>} {
    %c0 = arith.constant 0 : index
    %c0_0 = arith.constant 0 : index
    %c0_1 = arith.constant 0 : index
    %0 = vector.load %arg0[%c0, %c0_0, %c0_1] : memref<3x8x50xf32, #tpu.memory_space<vmem>>, vector<1x8x50xf32>
    %1 = vector.shape_cast %0 : vector<1x8x50xf32> to vector<8x50xf32>
    %2 = vector.extract_strided_slice %1 {offsets = [0, 0], sizes = [8, 48], strides = [1, 1]} : vector<8x50xf32> to vector<8x48xf32>
    %c0_2 = arith.constant 0 : index
    %3 = memref.load %arg2[%c0_2] : memref<22xf32, #tpu.memory_space<smem>>
    %c9 = arith.constant 9 : index
    %4 = memref.load %arg2[%c9] : memref<22xf32, #tpu.memory_space<smem>>
    %5 = vector.broadcast %3 : f32 to vector<8x48xf32>
    %6 = arith.mulf %5, %2 : vector<8x48xf32>
    %7 = vector.broadcast %4 : f32 to vector<8x48xf32>
    %8 = arith.mulf %7, %2 : vector<8x48xf32>
    %9 = vector.extract_strided_slice %1 {offsets = [0, 1], sizes = [8, 48], strides = [1, 1]} : vector<8x50xf32> to vector<8x48xf32>
    %c1 = arith.constant 1 : index
    %10 = memref.load %arg2[%c1] : memref<22xf32, #tpu.memory_space<smem>>
    %c10 = arith.constant 10 : index
    %11 = memref.load %arg2[%c10] : memref<22xf32, #tpu.memory_space<smem>>
    %12 = vector.broadcast %10 : f32 to vector<8x48xf32>
    %13 = arith.mulf %12, %9 : vector<8x48xf32>
    %14 = arith.addf %6, %13 : vector<8x48xf32>
    %15 = vector.broadcast %11 : f32 to vector<8x48xf32>
    %16 = arith.mulf %15, %9 : vector<8x48xf32>
    %17 = arith.addf %8, %16 : vector<8x48xf32>
    %18 = vector.extract_strided_slice %1 {offsets = [0, 2], sizes = [8, 48], strides = [1, 1]} : vector<8x50xf32> to vector<8x48xf32>
    %c2 = arith.constant 2 : index
    %19 = memref.load %arg2[%c2] : memref<22xf32, #tpu.memory_space<smem>>
    %c11 = arith.constant 11 : index
    %20 = memref.load %arg2[%c11] : memref<22xf32, #tpu.memory_space<smem>>
    %21 = vector.broadcast %19 : f32 to vector<8x48xf32>
    %22 = arith.mulf %21, %18 : vector<8x48xf32>
    %23 = arith.addf %14, %22 : vector<8x48xf32>
    %24 = vector.broadcast %20 : f32 to vector<8x48xf32>
    %25 = arith.mulf %24, %18 : vector<8x48xf32>
    %26 = arith.addf %17, %25 : vector<8x48xf32>
    %c1_3 = arith.constant 1 : index
    %c0_4 = arith.constant 0 : index
    %c0_5 = arith.constant 0 : index
    %27 = vector.load %arg0[%c1_3, %c0_4, %c0_5] : memref<3x8x50xf32, #tpu.memory_space<vmem>>, vector<1x8x50xf32>
    %28 = vector.shape_cast %27 : vector<1x8x50xf32> to vector<8x50xf32>
    %29 = vector.extract_strided_slice %28 {offsets = [0, 0], sizes = [8, 48], strides = [1, 1]} : vector<8x50xf32> to vector<8x48xf32>
    %c3 = arith.constant 3 : index
    %30 = memref.load %arg2[%c3] : memref<22xf32, #tpu.memory_space<smem>>
    %c12 = arith.constant 12 : index
    %31 = memref.load %arg2[%c12] : memref<22xf32, #tpu.memory_space<smem>>
    %32 = vector.broadcast %30 : f32 to vector<8x48xf32>
    %33 = arith.mulf %32, %29 : vector<8x48xf32>
    %34 = arith.addf %23, %33 : vector<8x48xf32>
    %35 = vector.broadcast %31 : f32 to vector<8x48xf32>
    %36 = arith.mulf %35, %29 : vector<8x48xf32>
    %37 = arith.addf %26, %36 : vector<8x48xf32>
    %38 = vector.extract_strided_slice %28 {offsets = [0, 1], sizes = [8, 48], strides = [1, 1]} : vector<8x50xf32> to vector<8x48xf32>
    %c4 = arith.constant 4 : index
    %39 = memref.load %arg2[%c4] : memref<22xf32, #tpu.memory_space<smem>>
    %c13 = arith.constant 13 : index
    %40 = memref.load %arg2[%c13] : memref<22xf32, #tpu.memory_space<smem>>
    %41 = vector.broadcast %39 : f32 to vector<8x48xf32>
    %42 = arith.mulf %41, %38 : vector<8x48xf32>
    %43 = arith.addf %34, %42 : vector<8x48xf32>
    %44 = vector.broadcast %40 : f32 to vector<8x48xf32>
    %45 = arith.mulf %44, %38 : vector<8x48xf32>
    %46 = arith.addf %37, %45 : vector<8x48xf32>
    %47 = vector.extract_strided_slice %28 {offsets = [0, 2], sizes = [8, 48], strides = [1, 1]} : vector<8x50xf32> to vector<8x48xf32>
    %c5 = arith.constant 5 : index
    %48 = memref.load %arg2[%c5] : memref<22xf32, #tpu.memory_space<smem>>
    %c14 = arith.constant 14 : index
    %49 = memref.load %arg2[%c14] : memref<22xf32, #tpu.memory_space<smem>>
    %50 = vector.broadcast %48 : f32 to vector<8x48xf32>
    %51 = arith.mulf %50, %47 : vector<8x48xf32>
    %52 = arith.addf %43, %51 : vector<8x48xf32>
    %53 = vector.broadcast %49 : f32 to vector<8x48xf32>
    %54 = arith.mulf %53, %47 : vector<8x48xf32>
    %55 = arith.addf %46, %54 : vector<8x48xf32>
    %c2_6 = arith.constant 2 : index
    %c0_7 = arith.constant 0 : index
    %c0_8 = arith.constant 0 : index
    %56 = vector.load %arg0[%c2_6, %c0_7, %c0_8] : memref<3x8x50xf32, #tpu.memory_space<vmem>>, vector<1x8x50xf32>
    %57 = vector.shape_cast %56 : vector<1x8x50xf32> to vector<8x50xf32>
    %58 = vector.extract_strided_slice %57 {offsets = [0, 0], sizes = [8, 48], strides = [1, 1]} : vector<8x50xf32> to vector<8x48xf32>
    %c6 = arith.constant 6 : index
    %59 = memref.load %arg2[%c6] : memref<22xf32, #tpu.memory_space<smem>>
    %c15 = arith.constant 15 : index
    %60 = memref.load %arg2[%c15] : memref<22xf32, #tpu.memory_space<smem>>
    %61 = vector.broadcast %59 : f32 to vector<8x48xf32>
    %62 = arith.mulf %61, %58 : vector<8x48xf32>
    %63 = arith.addf %52, %62 : vector<8x48xf32>
    %64 = vector.broadcast %60 : f32 to vector<8x48xf32>
    %65 = arith.mulf %64, %58 : vector<8x48xf32>
    %66 = arith.addf %55, %65 : vector<8x48xf32>
    %67 = vector.extract_strided_slice %57 {offsets = [0, 1], sizes = [8, 48], strides = [1, 1]} : vector<8x50xf32> to vector<8x48xf32>
    %c7 = arith.constant 7 : index
    %68 = memref.load %arg2[%c7] : memref<22xf32, #tpu.memory_space<smem>>
    %c16 = arith.constant 16 : index
    %69 = memref.load %arg2[%c16] : memref<22xf32, #tpu.memory_space<smem>>
    %70 = vector.broadcast %68 : f32 to vector<8x48xf32>
    %71 = arith.mulf %70, %67 : vector<8x48xf32>
    %72 = arith.addf %63, %71 : vector<8x48xf32>
    %73 = vector.broadcast %69 : f32 to vector<8x48xf32>
    %74 = arith.mulf %73, %67 : vector<8x48xf32>
    %75 = arith.addf %66, %74 : vector<8x48xf32>
    %76 = vector.extract_strided_slice %57 {offsets = [0, 2], sizes = [8, 48], strides = [1, 1]} : vector<8x50xf32> to vector<8x48xf32>
    %c8 = arith.constant 8 : index
    %77 = memref.load %arg2[%c8] : memref<22xf32, #tpu.memory_space<smem>>
    %c17 = arith.constant 17 : index
    %78 = memref.load %arg2[%c17] : memref<22xf32, #tpu.memory_space<smem>>
    %79 = vector.broadcast %77 : f32 to vector<8x48xf32>
    %80 = arith.mulf %79, %76 : vector<8x48xf32>
    %81 = arith.addf %72, %80 : vector<8x48xf32>
    %82 = vector.broadcast %78 : f32 to vector<8x48xf32>
    %83 = arith.mulf %82, %76 : vector<8x48xf32>
    %84 = arith.addf %75, %83 : vector<8x48xf32>
    %c18 = arith.constant 18 : index
    %85 = memref.load %arg2[%c18] : memref<22xf32, #tpu.memory_space<smem>>
    %86 = vector.broadcast %85 : f32 to vector<8x48xf32>
    %87 = arith.addf %81, %86 : vector<8x48xf32>
    %cst = arith.constant 0.000000e+00 : f32
    %88 = vector.broadcast %cst : f32 to vector<8x48xf32>
    %89 = arith.maximumf %87, %88 : vector<8x48xf32>
    %c0_9 = arith.constant 0 : index
    %c0_10 = arith.constant 0 : index
    %c0_11 = arith.constant 0 : index
    %90 = vector.load %arg3[%c0_9, %c0_10, %c0_11] : memref<2x1x48xf32, #tpu.memory_space<vmem>>, vector<1x1x48xf32>
    %91 = vector.shape_cast %90 : vector<1x1x48xf32> to vector<1x48xf32>
    %92 = vector.broadcast %91 : vector<1x48xf32> to vector<8x48xf32>
    %93 = arith.mulf %89, %92 : vector<8x48xf32>
    %c19 = arith.constant 19 : index
    %94 = memref.load %arg2[%c19] : memref<22xf32, #tpu.memory_space<smem>>
    %95 = vector.broadcast %94 : f32 to vector<8x48xf32>
    %96 = arith.addf %84, %95 : vector<8x48xf32>
    %cst_12 = arith.constant 0.000000e+00 : f32
    %97 = vector.broadcast %cst_12 : f32 to vector<8x48xf32>
    %98 = arith.maximumf %96, %97 : vector<8x48xf32>
    %c1_13 = arith.constant 1 : index
    %c0_14 = arith.constant 0 : index
    %c0_15 = arith.constant 0 : index
    %99 = vector.load %arg3[%c1_13, %c0_14, %c0_15] : memref<2x1x48xf32, #tpu.memory_space<vmem>>, vector<1x1x48xf32>
    %100 = vector.shape_cast %99 : vector<1x1x48xf32> to vector<1x48xf32>
    %101 = vector.broadcast %100 : vector<1x48xf32> to vector<8x48xf32>
    %102 = arith.mulf %98, %101 : vector<8x48xf32>
    %103 = arith.addf %93, %102 : vector<8x48xf32>
    %cst_16 = arith.constant dense<0.000000e+00> : vector<8xf32>
    %104 = vector.multi_reduction <add>, %103, %cst_16 [1] : vector<8x48xf32> to vector<8xf32>
    %105 = vector.shape_cast %104 : vector<8xf32> to vector<8x1xf32>
    %c0_17 = arith.constant 0 : index
    %c0_18 = arith.constant 0 : index
    %106 = vector.load %arg1[%c0_17, %c0_18] : memref<8x1xf32, #tpu.memory_space<vmem>>, vector<8x1xf32>
    %c20 = arith.constant 20 : index
    %107 = memref.load %arg2[%c20] : memref<22xf32, #tpu.memory_space<smem>>
    %108 = vector.broadcast %107 : f32 to vector<8x1xf32>
    %109 = arith.mulf %106, %108 : vector<8x1xf32>
    %110 = arith.addf %105, %109 : vector<8x1xf32>
    %c21 = arith.constant 21 : index
    %111 = memref.load %arg2[%c21] : memref<22xf32, #tpu.memory_space<smem>>
    %112 = vector.broadcast %111 : f32 to vector<8x1xf32>
    %113 = arith.addf %110, %112 : vector<8x1xf32>
    %cst_19 = arith.constant dense<0xFF800000> : vector<1xf32>
    %114 = vector.multi_reduction <maximumf>, %113, %cst_19 [0] : vector<8x1xf32> to vector<1xf32>
    %115 = vector.shape_cast %114 : vector<1xf32> to vector<1x1xf32>
    %cst_20 = arith.constant 0.000000e+00 : f32
    %116 = vector.broadcast %cst_20 : f32 to vector<1x1xf32>
    %117 = arith.maximumf %115, %116 : vector<1x1xf32>
    %118 = vector.broadcast %117 : vector<1x1xf32> to vector<8x1xf32>
    %119 = arith.subf %113, %118 : vector<8x1xf32>
    %120 = math.exp %119 : vector<8x1xf32>
    %cst_21 = arith.constant 0.000000e+00 : f32
    %121 = vector.broadcast %cst_21 : f32 to vector<1x1xf32>
    %122 = arith.subf %121, %117 : vector<1x1xf32>
    %123 = math.exp %122 : vector<1x1xf32>
    %cst_22 = arith.constant dense<0.000000e+00> : vector<1xf32>
    %124 = vector.multi_reduction <add>, %120, %cst_22 [0] : vector<8x1xf32> to vector<1xf32>
    %125 = vector.shape_cast %124 : vector<1xf32> to vector<1x1xf32>
    %126 = arith.addf %125, %123 : vector<1x1xf32>
    %127 = tpu.reciprocal %126 {approx = true} : vector<1x1xf32> -> vector<1x1xf32>
    %128 = arith.mulf %123, %127 : vector<1x1xf32>
    %c0_23 = arith.constant 0 : index
    %c0_24 = arith.constant 0 : index
    %129 = vector.load %arg4[%c0_23, %c0_24] : memref<9x1xf32, #tpu.memory_space<vmem>>, vector<1x1xf32>
    tpu.vector_store %arg4[%c0_23, %c0_24], %128 {strides = array<i32>} : memref<9x1xf32, #tpu.memory_space<vmem>>, vector<1x1xf32>,
    %130 = vector.broadcast %127 : vector<1x1xf32> to vector<8x1xf32>
    %131 = arith.mulf %120, %130 : vector<8x1xf32>
    %c1_25 = arith.constant 1 : index
    %c0_26 = arith.constant 0 : index
    %132 = vector.load %arg4[%c1_25, %c0_26] : memref<9x1xf32, #tpu.memory_space<vmem>>, vector<8x1xf32>
    tpu.vector_store %arg4[%c1_25, %c0_26], %131 {strides = array<i32>} : memref<9x1xf32, #tpu.memory_space<vmem>>, vector<8x1xf32>,
    return
  }
}

</mosaic_0001>

<llo_original>
// kernel: cnn_policy_forward.1
$region0: #{cnn_policy_forward.1}
  #allocation0 [shape = 'u32[]', space=smem, size = 0x4, offset = 0x4, fixed_abs, tag = 'smem constant byte address 0x4 - core index']
  #allocation1 [shape = 'u32[72,128]{1,0:T(1,128)}', space=vmem, size = 0x9000, scoped, tag = 'internal scratch']
  %s0 = inlined_call_operand.hbm [shape: f32[3,8,50], index: 0, kind: input, shape index: {}]
  %s1 = inlined_call_operand.vmem [shape: f32[8,1], index: 1, kind: input, shape index: {}]
  %s2 = inlined_call_operand.vmem [shape: f32[22], index: 2, kind: input, shape index: {}]
  %s3 = inlined_call_operand.vmem [shape: f32[2,1,48], index: 3, kind: input, shape index: {}]
  %s4 = inlined_call_operand.vmem [shape: f32[9,1], index: 4, kind: output, shape index: {}]
  %s5 = sld [smem:[#allocation0]]
  $region34: #{cnn_policy_forward.1} parent=0
    _
  %s7 = ssub.s32 1, %s5
  %s8 = scalar_select 0, %s7, %s5
  $region1: #{cnn_policy_forward.1} parent=0
    #allocation2 [shape = 'u8[12288]{0}', space=vmem, size = 0x3000, scoped, tag = 'input window, operand 0, single buffered']
    #allocation3 [shape = 's32[1]{0}', space=sflag, size = 0x4, scoped, tag = 'scoped memory for cnn_policy_forward.1']
    #allocation4 [shape = 's32[1]{0}', space=sflag, size = 0x4, scoped, tag = 'scoped memory for cnn_policy_forward.1']
    #allocation5 [shape = 'u8[512]{0}', space=smem, size = 0x200, scoped, tag = 'input window, operand 2, single buffered']
    %9 = vsyncpa [#allocation3], 0
    %10 = vsyncpa [#allocation4], 0
    // Predicated region
    $region2: #{cnn_policy_forward.1} parent=1 // pred_check
      _
    $region3: #{cnn_policy_forward.1} parent=1 // pred_check_branch
      %12 = sbr.rel (0) target = $region5
    $region4: #{cnn_policy_forward.1} parent=1 // pred_region
      %14 = vsyncadd [#allocation3], 0
      %s15 = sshll.u32 %s0, 4
      %s16 = int_to_ptr.hbm [resolvable:$true] %s15
      %s17 = sshll.u32 [#allocation2], 4
      %s18 = int_to_ptr.vmem [resolvable:$true] %s17
      %23 = dma.hbm_to_vmem [thread:$0]  %s16, 384, %s18, [#allocation3], 128, 128, 8
    $region5: #{cnn_policy_forward.1} parent=1 // pred_fallthru
      _
    // Predicated region
    $region6: #{cnn_policy_forward.1} parent=1 // pred_check
      _
    $region7: #{cnn_policy_forward.1} parent=1 // pred_check_branch
      %25 = sbr.rel (0) target = $region9
    $region8: #{cnn_policy_forward.1} parent=1 // pred_region
      _
    $region9: #{cnn_policy_forward.1} parent=1 // pred_fallthru
      _
    // Predicated region
    $region10: #{cnn_policy_forward.1} parent=1 // pred_check
      _
    $region11: #{cnn_policy_forward.1} parent=1 // pred_check_branch
      %27 = sbr.rel (0) target = $region13
    $region12: #{cnn_policy_forward.1} parent=1 // pred_region
      %29 = vsyncadd [#allocation4], 0
      %s31 = sshll.u32 %s2, 4
      %s32 = int_to_ptr.vmem [resolvable:$true] %s31
      %34 = dma.vmem_to_smem %s32, 16, [#allocation5], [#allocation4]
    $region13: #{cnn_policy_forward.1} parent=1 // pred_fallthru
      _
    // Predicated region
    $region14: #{cnn_policy_forward.1} parent=1 // pred_check
      _
    $region15: #{cnn_policy_forward.1} parent=1 // pred_check_branch
      %36 = sbr.rel (0) target = $region17
    $region16: #{cnn_policy_forward.1} parent=1 // pred_region
      _
    $region17: #{cnn_policy_forward.1} parent=1 // pred_fallthru
      _
    // Predicated region
    $region18: #{cnn_policy_forward.1} parent=1 // pred_check
      _
    $region19: #{cnn_policy_forward.1} parent=1 // pred_check_branch
      %38 = sbr.rel (0) target = $region21
    $region20: #{cnn_policy_forward.1} parent=1 // pred_region
      %40 = dma.done [#allocation3], 384
    $region21: #{cnn_policy_forward.1} parent=1 // pred_fallthru
      _
    // Predicated region
    $region22: #{cnn_policy_forward.1} parent=1 // pred_check
      _
    $region23: #{cnn_policy_forward.1} parent=1 // pred_check_branch
      %42 = sbr.rel (0) target = $region25
    $region24: #{cnn_policy_forward.1} parent=1 // pred_region
      %44 = dma.done [#allocation4], 16
    $region25: #{cnn_policy_forward.1} parent=1 // pred_fallthru
      _
    %45 = sfence
    %v46 = vld [vmem:[#allocation2] sm:$0xff]
    %s47 = sld [smem:[#allocation5]]
    %s48 = sld [smem:[#allocation5 + $0x9]]
    %v49 = vstv %s47
    %v50 = vmul.f32 %v49, %v46
    %v51 = vstv %s48
    %v52 = vmul.f32 %v51, %v46
    %s53 = sld [smem:[#allocation5 + $0x1]]
    %s54 = sld [smem:[#allocation5 + $0xa]]
    %v55 = vstv %s53
    %v56 = vmul.f32 %v55, %v46
    %58 = vrot.lane.b32.xlu0 %v56, 127
    %v59 = vpop.permute.xlu0 %58
    %v61 = vadd.f32 %v50, %v59
    %v62 = vstv %s54
    %v63 = vmul.f32 %v62, %v46
    %65 = vrot.lane.b32.xlu0 %v63, 127
    %v66 = vpop.permute.xlu0 %65
    %v68 = vadd.f32 %v52, %v66
    %s69 = sld [smem:[#allocation5 + $0x2]]
    %s70 = sld [smem:[#allocation5 + $0xb]]
    %v71 = vstv %s69
    %v72 = vmul.f32 %v71, %v46
    %74 = vrot.lane.b32.xlu0 %v72, 126
    %v75 = vpop.permute.xlu0 %74
    %v77 = vadd.f32 %v61, %v75
    %v78 = vstv %s70
    %v79 = vmul.f32 %v78, %v46
    %81 = vrot.lane.b32.xlu0 %v79, 126
    %v82 = vpop.permute.xlu0 %81
    %v84 = vadd.f32 %v68, %v82
    %s85 = scalar_lea.vmem [#allocation2], 8
    %v86 = vld [vmem:[%s85] sm:$0xff]
    %s87 = sld [smem:[#allocation5 + $0x3]]
    %s88 = sld [smem:[#allocation5 + $0xc]]
    %v89 = vstv %s87
    %v90 = vmul.f32 %v89, %v86
    %v91 = vadd.f32 %v77, %v90
    %v92 = vstv %s88
    %v93 = vmul.f32 %v92, %v86
    %v94 = vadd.f32 %v84, %v93
    %s95 = sld [smem:[#allocation5 + $0x4]]
    %s96 = sld [smem:[#allocation5 + $0xd]]
    %v97 = vstv %s95
    %v98 = vmul.f32 %v97, %v86
    %100 = vrot.lane.b32.xlu0 %v98, 127
    %v101 = vpop.permute.xlu0 %100
    %v103 = vadd.f32 %v91, %v101
    %v104 = vstv %s96
    %v105 = vmul.f32 %v104, %v86
    %107 = vrot.lane.b32.xlu0 %v105, 127
    %v108 = vpop.permute.xlu0 %107
    %v110 = vadd.f32 %v94, %v108
    %s111 = sld [smem:[#allocation5 + $0x5]]
    %s112 = sld [smem:[#allocation5 + $0xe]]
    %v113 = vstv %s111
    %v114 = vmul.f32 %v113, %v86
    %116 = vrot.lane.b32.xlu0 %v114, 126
    %v117 = vpop.permute.xlu0 %116
    %v119 = vadd.f32 %v103, %v117
    %v120 = vstv %s112
    %v121 = vmul.f32 %v120, %v86
    %123 = vrot.lane.b32.xlu0 %v121, 126
    %v124 = vpop.permute.xlu0 %123
    %v126 = vadd.f32 %v110, %v124
    %s127 = scalar_lea.vmem [#allocation2], 16
    %v128 = vld [vmem:[%s127] sm:$0xff]
    %s129 = sld [smem:[#allocation5 + $0x6]]
    %s130 = sld [smem:[#allocation5 + $0xf]]
    %v131 = vstv %s129
    %v132 = vmul.f32 %v131, %v128
    %v133 = vadd.f32 %v119, %v132
    %v134 = vstv %s130
    %v135 = vmul.f32 %v134, %v128
    %v136 = vadd.f32 %v126, %v135
    %s137 = sld [smem:[#allocation5 + $0x7]]
    %s138 = sld [smem:[#allocation5 + $0x10]]
    %v139 = vstv %s137
    %v140 = vmul.f32 %v139, %v128
    %142 = vrot.lane.b32.xlu0 %v140, 127
    %v143 = vpop.permute.xlu0 %142
    %v145 = vadd.f32 %v133, %v143
    %v146 = vstv %s138
    %v147 = vmul.f32 %v146, %v128
    %149 = vrot.lane.b32.xlu0 %v147, 127
    %v150 = vpop.permute.xlu0 %149
    %v152 = vadd.f32 %v136, %v150
    %s153 = sld [smem:[#allocation5 + $0x8]]
    %s154 = sld [smem:[#allocation5 + $0x11]]
    %v155 = vstv %s153
    %v156 = vmul.f32 %v155, %v128
    %158 = vrot.lane.b32.xlu0 %v156, 126
    %v159 = vpop.permute.xlu0 %158
    %v161 = vadd.f32 %v145, %v159
    %v162 = vstv %s154
    %v163 = vmul.f32 %v162, %v128
    %165 = vrot.lane.b32.xlu0 %v163, 126
    %v166 = vpop.permute.xlu0 %165
    %v168 = vadd.f32 %v152, %v166
    %s169 = sld [smem:[#allocation5 + $0x12]]
    %v170 = vstv %s169
    %v171 = vadd.f32 %v161, %v170
    %v172 = vmax.f32 %v171, 0.0
    %v173 = vld [vmem:[%s3] sm:$0x1]
    %v175 = vperm.slane %v173, 0
    %v177 = vmul.f32 %v172, %v175
    %s178 = sld [smem:[#allocation5 + $0x13]]
    %v179 = vstv %s178
    %v180 = vadd.f32 %v168, %v179
    %v181 = vmax.f32 %v180, 0.0
    %s182 = scalar_lea.vmem %s3, 1
    %v183 = vld [vmem:[%s182] sm:$0x1]
    %v185 = vperm.slane %v183, 0
    %v187 = vmul.f32 %v181, %v185
    %v188 = vadd.f32 %v177, %v187
    %vm189 = vcmask 392192
    %v190 = vsel %vm189, %v188, 0.0
    %191 = vadd.xlane.f32.xlu0 %v190
    %v192 = vpop.xlane.xlu0 %191
    %v193 = vld [vmem:[%s1] sm:$0xff]
    %s194 = sld [smem:[#allocation5 + $0x14]]
    %v195 = vstv %s194
    %v196 = vmul.f32 %v193, %v195
    %v197 = vadd.f32 %v192, %v196
    %s198 = sld [smem:[#allocation5 + $0x15]]
    %v199 = vstv %s198
    %v200 = vadd.f32 %v197, %v199
    %vm201 = vcmask 7168
    %v202 = vsel %vm201, %v200, -inf
    %v203 = vrot.slane %v202, 4
    %v204 = vmax.f32 %v202, %v203
    %v205 = vrot.slane %v204, 2
    %v206 = vmax.f32 %v204, %v205
    %v207 = vrot.slane %v206, 1
    %v208 = vmax.f32 %v206, %v207
    %v209 = vmax.f32 %v208, 0.0
    %v210 = vsub.f32 %v200, %v209
    %v211 = vmul.f32 %v210, 1.442695
    %v212 = vpow.pop %v211
    %v213 = vsub.f32 0.0, %v209
    %v214 = vmul.f32 %v213, 1.442695
    %v215 = vpow.pop %v214
    %v216 = vsel %vm201, %v212, 0.0
    %v217 = vrot.slane %v216, 4
    %v218 = vadd.f32 %v216, %v217
    %v219 = vrot.slane %v218, 2
    %v220 = vadd.f32 %v218, %v219
    %v221 = vrot.slane %v220, 1
    %v222 = vadd.f32 %v220, %v221
    %v223 = vadd.f32 %v222, %v215
    %v224 = vrcp.pop %v223
    %v225 = vmul.f32 %v215, %v224
    %vm226 = vcmask 0
    %227 = vst.msk [vmem:[%s4] sm:$0x1] %vm226, %v225
    %v228 = vmul.f32 %v212, %v224
    %229 = vst.msk [vmem:[%s4 + $0x1] sm:$0xff] %vm201, %v228
    // Predicated region
    $region26: #{cnn_policy_forward.1} parent=1 // pred_check
      _
    $region27: #{cnn_policy_forward.1} parent=1 // pred_check_branch
      %231 = sbr.rel (0) target = $region29
    $region28: #{cnn_policy_forward.1} parent=1 // pred_region
      _
    $region29: #{cnn_policy_forward.1} parent=1 // pred_fallthru
      _
    // Predicated region
    $region30: #{cnn_policy_forward.1} parent=1 // pred_check
      _
    $region31: #{cnn_policy_forward.1} parent=1 // pred_check_branch
      %233 = sbr.rel (0) target = $region33
    $region32: #{cnn_policy_forward.1} parent=1 // pred_region
      _
    $region33: #{cnn_policy_forward.1} parent=1 // pred_fallthru
      _
    %234 = vsyncpa [#allocation3], 1
    %235 = vsyncpa [#allocation4], 1

</llo_original>
